<compile_context>
chip_gen: v5e
topology: v5e:2x2
jax: 0.10.0
libtpu: 0.0.40
codegen_flags: <defaults>
</compile_context>

<pallas_src>
import jax
import jax.numpy as jnp
from jax import lax
from jax.experimental import pallas as pl
from jax.experimental.pallas import tpu as pltpu

B, S, H, L = 2, 8, 32, 4          # batch, seq_len, hidden_size, num_class
FFN = 64                          # encoder intermediate size
VOCAB = 50
HL = H + L                        # width of [hidden ; soft-label] concat (36)
BS = B * S                        # collapsed row count (16)
LANES = 128
NEG = -1e9

# ---- bf16 weight-slab row offsets (every row is 128 lanes wide) --------------
R_QKVO = 0            # rows [0,32):   lanes [0:H)=wq [H:2H)=wk [2H:3H)=wv [3H:4H)=wo
R_W1   = R_QKVO + H   # rows [32,64):  lanes [0:FFN) = w1
R_W2   = R_W1 + H     # rows [64,128): lanes [0:H)   = w2
R_WA   = R_W2 + FFN   # rows [128,160): lanes [0:L)=ws, [L:L+HL)=w0h
R_W0L  = R_WA + H     # rows [160,164) used: lanes [0:HL) = w0l
R_WB   = R_W0L + 8    # rows [168,204) used: lanes [0:L)  = w1e
W_ROWS = R_WB + 40    # 208 total rows

# ---- f32 bias / LayerNorm slab row indices -----------------------------------
BR_EMB_G, BR_EMB_B = 0, 1
BR_QKV   = 2          # [bq | bk | bv | 0]
BR_BO    = 3
BR_LN1G, BR_LN1B = 4, 5
BR_B1    = 6
BR_B2    = 7
BR_LN2G, BR_LN2B = 8, 9
BR_BA    = 10         # [bs | b0 | 0]
BR_LNG, BR_LNB = 11, 12
BR_BB    = 13         # [b1e | 0]
BR_SMASK = 14         # 1.0 on lanes [0,L), 0.0 elsewhere
B_ROWS   = 16


# ----------------------------------------------------------------------------
# helpers (traced inside the kernel)
# ----------------------------------------------------------------------------
def _ln(x, g, b, eps):
    m = jnp.mean(x, axis=-1, keepdims=True)
    v = jnp.mean((x - m) ** 2, axis=-1, keepdims=True)
    return (x - m) * lax.rsqrt(v + eps) * g + b


def _gelu(x):
    # tanh-approx gelu (tanh -> EUP); backbone is synthetic so erf/tanh delta is moot
    c = 0.7978845608028654  # sqrt(2/pi)
    return 0.5 * x * (1.0 + jnp.tanh(c * x * (1.0 + 0.044715 * x * x)))


def _mm(a, w_bf16):
    # bf16 operands, f32 accumulation (native MXU path); weights are already bf16 in the slab
    return jnp.dot(a.astype(jnp.bfloat16), w_bf16, preferred_element_type=jnp.float32)


def _softmax_last(x):
    x = x - jnp.max(x, axis=-1, keepdims=True)
    e = jnp.exp(x)
    return e * pl.reciprocal(jnp.sum(e, axis=-1, keepdims=True), approx=True)


# ----------------------------------------------------------------------------
# Fused kernel: embedding LN -> encoder layer -> span head, whole batch at once
# ----------------------------------------------------------------------------
def bert_span_fused_kernel(act_ref, w_ref, b_ref, out_ref):
    emb   = act_ref[:, :H]               # (BS, H)  token+position embeddings (f32)
    amask = act_ref[:, H:H + BS]          # (BS, BS) additive attention mask (block-diag + key padding)

    # --- embedding LayerNorm -------------------------------------------------
    x = _ln(emb, b_ref[BR_EMB_G:BR_EMB_G + 1, :H], b_ref[BR_EMB_B:BR_EMB_B + 1, :H], 1e-12)

    # --- fused Q|K|V projection: ONE MXU push, ONE fused bias add -------------
    qkvo = _mm(x, w_ref[R_QKVO:R_QKVO + H, :]) + b_ref[BR_QKV:BR_QKV + 1, :]   # (BS, 128)
    q = qkvo[:, 0:H]
    k = qkvo[:, H:2 * H]
    v = qkvo[:, 2 * H:3 * H]

    # --- block-masked attention over all BS rows at once ----------------------
    scale = 1.0 / (float(H) ** 0.5)
    scores = lax.dot_general(q.astype(jnp.bfloat16), k.astype(jnp.bfloat16),
                             (((1,), (1,)), ((), ())),
                             preferred_element_type=jnp.float32) * scale + amask   # (BS, BS)
    p = _softmax_last(scores)
    ctx = jnp.dot(p.astype(jnp.bfloat16), v.astype(jnp.bfloat16),
                  preferred_element_type=jnp.float32)                              # (BS, H)

    attn = _mm(ctx, w_ref[R_QKVO:R_QKVO + H, 3 * H:4 * H]) + b_ref[BR_BO:BR_BO + 1, :H]
    h1 = _ln(x + attn, b_ref[BR_LN1G:BR_LN1G + 1, :H], b_ref[BR_LN1B:BR_LN1B + 1, :H], 1e-12)

    # --- FFN -------------------------------------------------------------------
    ff = _gelu(_mm(h1, w_ref[R_W1:R_W1 + H, :FFN]) + b_ref[BR_B1:BR_B1 + 1, :FFN])
    ff = _mm(ff, w_ref[R_W2:R_W2 + FFN, :H]) + b_ref[BR_B2:BR_B2 + 1, :H]
    seq = _ln(h1 + ff, b_ref[BR_LN2G:BR_LN2G + 1, :H], b_ref[BR_LN2B:BR_LN2B + 1, :H], 1e-12)

    # --- span head (dropout = identity in eval mode) ---------------------------
    # fused seq projection: lanes [0:L) = start_logits, lanes [L:L+HL) = seq@w0h, rest exactly 0
    fused = _mm(seq, w_ref[R_WA:R_WA + H, :]) + b_ref[BR_BA:BR_BA + 1, :]          # (BS, 128)
    start = fused[:, :L]
    label = _softmax_last(start)                                                    # soft_label inference path

    # cat([seq, label], -1) @ W0 == seq @ W0[:H] + label @ W0[H:]
    pre_y = fused[:, L:L + HL] + _mm(label, w_ref[R_W0L:R_W0L + L, :HL])
    y = _ln(jnp.tanh(pre_y), b_ref[BR_LNG:BR_LNG + 1, :HL], b_ref[BR_LNB:BR_LNB + 1, :HL], 1e-5)
    end128 = _mm(y, w_ref[R_WB:R_WB + HL, :]) + b_ref[BR_BB:BR_BB + 1, :]          # (BS, 128), lanes >= L are 0

    # lane-dense stores: start at lanes [0,L) (other lanes masked to 0), end at lanes [0,L)
    out_ref[0, :, :] = fused * b_ref[BR_SMASK:BR_SMASK + 1, :]
    out_ref[1, :, :] = end128


# ----------------------------------------------------------------------------
# Wrapper
# ----------------------------------------------------------------------------
def bert_span_forward(input_ids, attention_mask, params):
    # embedding lookup + position add (glue, plain JAX; gather stays outside)
    emb = params["tok_emb"][input_ids] + params["pos_emb"][None, :, :]          # (B, S, H)
    emb = emb.reshape(BS, H).astype(jnp.float32)

    # (BS, BS) additive attention mask: 0 where (same batch AND key valid), -1e9 otherwise
    key_valid = attention_mask.reshape(BS).astype(bool)
    row_b = jnp.arange(BS) // S
    same_batch = row_b[:, None] == row_b[None, :]
    amask = jnp.where(same_batch & key_valid[None, :], 0.0, NEG).astype(jnp.float32)

    act = jnp.concatenate([emb, amask], axis=-1)                                # (BS, H+BS) activation slab

    out = pl.pallas_call(
        bert_span_fused_kernel,
        out_shape=jax.ShapeDtypeStruct((2, BS, LANES), jnp.float32),
        # grid-less call: 3 whole-array VMEM-resident inputs, 1 lane-dense output
        in_specs=[pl.BlockSpec(memory_space=pltpu.MemorySpace.VMEM)] * 3,
        out_specs=pl.BlockSpec(memory_space=pltpu.MemorySpace.VMEM),
    )(act, params["w_slab"], params["b_slab"])

    start_logits = out[0, :, :L].reshape(B, S, L)
    end_logits = out[1, :, :L].reshape(B, S, L)
    return start_logits, end_logits


# ----------------------------------------------------------------------------
# Parameter construction (deterministic, synthetic) -> pre-packed slabs
# ----------------------------------------------------------------------------
def make_params(key):
    ks = jax.random.split(key, 32)
    n = lambda k, shape: 0.02 * jax.random.normal(k, shape, jnp.float32)

    tok_emb = n(ks[0], (VOCAB, H))
    pos_emb = n(ks[1], (S, H))

    wq, wk = n(ks[2], (H, H)), n(ks[3], (H, H))
    wv, wo = n(ks[4], (H, H)), n(ks[5], (H, H))
    w1, w2 = n(ks[6], (H, FFN)), n(ks[7], (FFN, H))
    ws = n(ks[8], (H, L))
    w0h = n(ks[9], (H, HL))          # top H rows of dense_0 weight (H+L, H+L)
    w0l = n(ks[10], (L, HL))         # bottom L rows of dense_0 weight
    w1e = n(ks[11], (HL, L))

    # ---- bf16 weight slab (built once; all matmul weights live here) ----
    wslab = jnp.zeros((W_ROWS, LANES), jnp.float32)
    wslab = wslab.at[R_QKVO:R_QKVO + H, 0:H].set(wq)
    wslab = wslab.at[R_QKVO:R_QKVO + H, H:2 * H].set(wk)
    wslab = wslab.at[R_QKVO:R_QKVO + H, 2 * H:3 * H].set(wv)
    wslab = wslab.at[R_QKVO:R_QKVO + H, 3 * H:4 * H].set(wo)
    wslab = wslab.at[R_W1:R_W1 + H, :FFN].set(w1)
    wslab = wslab.at[R_W2:R_W2 + FFN, :H].set(w2)
    wslab = wslab.at[R_WA:R_WA + H, :L].set(ws)
    wslab = wslab.at[R_WA:R_WA + H, L:L + HL].set(w0h)
    wslab = wslab.at[R_W0L:R_W0L + L, :HL].set(w0l)
    wslab = wslab.at[R_WB:R_WB + HL, :L].set(w1e)
    wslab = wslab.astype(jnp.bfloat16)

    # ---- f32 bias / LayerNorm slab (one row per original (1, ·) vector) ----
    b1r = lambda k, w: 0.02 * jax.random.normal(k, (w,), jnp.float32)
    bslab = jnp.zeros((B_ROWS, LANES), jnp.float32)
    bslab = bslab.at[BR_EMB_G, :H].set(1.0 + b1r(ks[12], H))
    bslab = bslab.at[BR_EMB_B, :H].set(b1r(ks[13], H))
    bslab = bslab.at[BR_QKV, 0:H].set(b1r(ks[14], H))            # bq
    bslab = bslab.at[BR_QKV, H:2 * H].set(b1r(ks[15], H))        # bk
    bslab = bslab.at[BR_QKV, 2 * H:3 * H].set(b1r(ks[16], H))    # bv
    bslab = bslab.at[BR_BO, :H].set(b1r(ks[17], H))
    bslab = bslab.at[BR_LN1G, :H].set(1.0 + b1r(ks[18], H))
    bslab = bslab.at[BR_LN1B, :H].set(b1r(ks[19], H))
    bslab = bslab.at[BR_B1, :FFN].set(b1r(ks[20], FFN))
    bslab = bslab.at[BR_B2, :H].set(b1r(ks[21], H))
    bslab = bslab.at[BR_LN2G, :H].set(1.0 + b1r(ks[22], H))
    bslab = bslab.at[BR_LN2B, :H].set(b1r(ks[23], H))
    bslab = bslab.at[BR_BA, 0:L].set(b1r(ks[24], L))             # bs
    bslab = bslab.at[BR_BA, L:L + HL].set(b1r(ks[25], HL))       # b0
    bslab = bslab.at[BR_LNG, :HL].set(1.0 + b1r(ks[26], HL))
    bslab = bslab.at[BR_LNB, :HL].set(b1r(ks[27], HL))
    bslab = bslab.at[BR_BB, :L].set(b1r(ks[28], L))              # b1e
    bslab = bslab.at[BR_SMASK, :L].set(1.0)                      # start-lane mask

    return {"tok_emb": tok_emb, "pos_emb": pos_emb, "w_slab": wslab, "b_slab": bslab}


if __name__ == "__main__":
    key = jax.random.PRNGKey(0)
    pkey, ikey = jax.random.split(key)
    params = make_params(pkey)

    input_ids = jax.random.randint(ikey, (B, S), 0, VOCAB, dtype=jnp.int32)
    attention_mask = jnp.ones((B, S), jnp.int32).at[1, S - 2:].set(0)

    fwd = jax.jit(bert_span_forward)
    start_logits, end_logits = fwd(input_ids, attention_mask, params)
    jax.block_until_ready((start_logits, end_logits))

    assert start_logits.shape == (B, S, L) and end_logits.shape == (B, S, L)
    assert bool(jnp.all(jnp.isfinite(start_logits))) and bool(jnp.all(jnp.isfinite(end_logits)))
    print("KERNEL_OK")
</pallas_src>

<mosaic_0001>
module attributes {stable_mosaic.version = 11 : i64} {
  func.func @bert_span_fused_kernel(%arg0: memref<16x48xf32, #tpu.memory_space<vmem>>, %arg1: memref<208x128xbf16, #tpu.memory_space<vmem>>, %arg2: memref<16x128xf32, #tpu.memory_space<vmem>>, %arg3: memref<2x16x128xf32, #tpu.memory_space<vmem>>) attributes {dimension_semantics = [], scalar_prefetch = 0 : i64, scratch_operands = 0 : i64, tpu.core_type = #tpu.core_type<tc>} {
    %c0 = arith.constant 0 : index
    %c0_0 = arith.constant 0 : index
    %0 = vector.load %arg0[%c0, %c0_0] : memref<16x48xf32, #tpu.memory_space<vmem>>, vector<16x32xf32>
    %c0_1 = arith.constant 0 : index
    %c32 = arith.constant 32 : index
    %1 = vector.load %arg0[%c0_1, %c32] : memref<16x48xf32, #tpu.memory_space<vmem>>, vector<16x16xf32>
    %c0_2 = arith.constant 0 : index
    %c0_3 = arith.constant 0 : index
    %2 = vector.load %arg2[%c0_2, %c0_3] : memref<16x128xf32, #tpu.memory_space<vmem>>, vector<1x32xf32>
    %c1 = arith.constant 1 : index
    %c0_4 = arith.constant 0 : index
    %3 = vector.load %arg2[%c1, %c0_4] : memref<16x128xf32, #tpu.memory_space<vmem>>, vector<1x32xf32>
    %cst = arith.constant dense<0.000000e+00> : vector<16xf32>
    %4 = vector.multi_reduction <add>, %0, %cst [1] : vector<16x32xf32> to vector<16xf32>
    %5 = vector.shape_cast %4 : vector<16xf32> to vector<16x1xf32>
    %cst_5 = arith.constant 3.200000e+01 : f32
    %6 = vector.broadcast %cst_5 : f32 to vector<16x1xf32>
    %7 = arith.divf %5, %6 : vector<16x1xf32>
    %8 = vector.broadcast %7 : vector<16x1xf32> to vector<16x32xf32>
    %9 = arith.subf %0, %8 : vector<16x32xf32>
    %10 = arith.mulf %9, %9 : vector<16x32xf32>
    %cst_6 = arith.constant dense<0.000000e+00> : vector<16xf32>
    %11 = vector.multi_reduction <add>, %10, %cst_6 [1] : vector<16x32xf32> to vector<16xf32>
    %12 = vector.shape_cast %11 : vector<16xf32> to vector<16x1xf32>
    %cst_7 = arith.constant 3.200000e+01 : f32
    %13 = vector.broadcast %cst_7 : f32 to vector<16x1xf32>
    %14 = arith.divf %12, %13 : vector<16x1xf32>
    %15 = vector.broadcast %7 : vector<16x1xf32> to vector<16x32xf32>
    %16 = arith.subf %0, %15 : vector<16x32xf32>
    %cst_8 = arith.constant 9.99999996E-13 : f32
    %17 = vector.broadcast %cst_8 : f32 to vector<16x1xf32>
    %18 = arith.addf %14, %17 : vector<16x1xf32>
    %19 = math.rsqrt %18 : vector<16x1xf32>
    %20 = vector.broadcast %19 : vector<16x1xf32> to vector<16x32xf32>
    %21 = arith.mulf %16, %20 : vector<16x32xf32>
    %22 = vector.broadcast %2 : vector<1x32xf32> to vector<16x32xf32>
    %23 = arith.mulf %21, %22 : vector<16x32xf32>
    %24 = vector.broadcast %3 : vector<1x32xf32> to vector<16x32xf32>
    %25 = arith.addf %23, %24 : vector<16x32xf32>
    %c0_9 = arith.constant 0 : index
    %c0_10 = arith.constant 0 : index
    %26 = vector.load %arg1[%c0_9, %c0_10] : memref<208x128xbf16, #tpu.memory_space<vmem>>, vector<32x128xbf16>
    %27 = arith.truncf %25 : vector<16x32xf32> to vector<16x32xbf16>
    %cst_11 = arith.constant dense<0.000000e+00> : vector<16x128xf32>
    %28 = tpu.matmul %27, %26, %cst_11 {dimension_numbers = #tpu.dot_dimension_numbers<[1], [0], [0], [1], [0, 0, 1, 1], [], []>} : vector<16x32xbf16>, vector<32x128xbf16>, vector<16x128xf32> -> vector<16x128xf32>
    %c2 = arith.constant 2 : index
    %c0_12 = arith.constant 0 : index
    %29 = vector.load %arg2[%c2, %c0_12] : memref<16x128xf32, #tpu.memory_space<vmem>>, vector<1x128xf32>
    %30 = vector.broadcast %29 : vector<1x128xf32> to vector<16x128xf32>
    %31 = arith.addf %28, %30 : vector<16x128xf32>
    %32 = vector.extract_strided_slice %31 {offsets = [0, 0], sizes = [16, 32], strides = [1, 1]} : vector<16x128xf32> to vector<16x32xf32>
    %33 = vector.extract_strided_slice %31 {offsets = [0, 32], sizes = [16, 32], strides = [1, 1]} : vector<16x128xf32> to vector<16x32xf32>
    %34 = vector.extract_strided_slice %31 {offsets = [0, 64], sizes = [16, 32], strides = [1, 1]} : vector<16x128xf32> to vector<16x32xf32>
    %35 = arith.truncf %32 : vector<16x32xf32> to vector<16x32xbf16>
    %36 = arith.truncf %33 : vector<16x32xf32> to vector<16x32xbf16>
    %cst_13 = arith.constant dense<0.000000e+00> : vector<16x16xf32>
    %37 = tpu.matmul %35, %36, %cst_13 {dimension_numbers = #tpu.dot_dimension_numbers<[1], [1], [0], [0], [0, 0, 1, 0], [], []>} : vector<16x32xbf16>, vector<16x32xbf16>, vector<16x16xf32> -> vector<16x16xf32>
    %cst_14 = arith.constant 0.176776692 : f32
    %38 = vector.broadcast %cst_14 : f32 to vector<16x16xf32>
    %39 = arith.mulf %37, %38 : vector<16x16xf32>
    %40 = arith.addf %39, %1 : vector<16x16xf32>
    %cst_15 = arith.constant dense<0xFF800000> : vector<16xf32>
    %41 = vector.multi_reduction <maximumf>, %40, %cst_15 [1] : vector<16x16xf32> to vector<16xf32>
    %42 = vector.shape_cast %41 : vector<16xf32> to vector<16x1xf32>
    %43 = vector.broadcast %42 : vector<16x1xf32> to vector<16x16xf32>
    %44 = arith.subf %40, %43 : vector<16x16xf32>
    %45 = math.exp %44 : vector<16x16xf32>
    %cst_16 = arith.constant dense<0.000000e+00> : vector<16xf32>
    %46 = vector.multi_reduction <add>, %45, %cst_16 [1] : vector<16x16xf32> to vector<16xf32>
    %47 = vector.shape_cast %46 : vector<16xf32> to vector<16x1xf32>
    %48 = tpu.reciprocal %47 {approx = true} : vector<16x1xf32> -> vector<16x1xf32>
    %49 = vector.broadcast %48 : vector<16x1xf32> to vector<16x16xf32>
    %50 = arith.mulf %45, %49 : vector<16x16xf32>
    %51 = arith.truncf %50 : vector<16x16xf32> to vector<16x16xbf16>
    %52 = arith.truncf %34 : vector<16x32xf32> to vector<16x32xbf16>
    %cst_17 = arith.constant dense<0.000000e+00> : vector<16x32xf32>
    %53 = tpu.matmul %51, %52, %cst_17 {dimension_numbers = #tpu.dot_dimension_numbers<[1], [0], [0], [1], [0, 0, 1, 1], [], []>} : vector<16x16xbf16>, vector<16x32xbf16>, vector<16x32xf32> -> vector<16x32xf32>
    %c0_18 = arith.constant 0 : index
    %c96 = arith.constant 96 : index
    %54 = vector.load %arg1[%c0_18, %c96] : memref<208x128xbf16, #tpu.memory_space<vmem>>, vector<32x32xbf16>
    %55 = arith.truncf %53 : vector<16x32xf32> to vector<16x32xbf16>
    %cst_19 = arith.constant dense<0.000000e+00> : vector<16x32xf32>
    %56 = tpu.matmul %55, %54, %cst_19 {dimension_numbers = #tpu.dot_dimension_numbers<[1], [0], [0], [1], [0, 0, 1, 1], [], []>} : vector<16x32xbf16>, vector<32x32xbf16>, vector<16x32xf32> -> vector<16x32xf32>
    %c3 = arith.constant 3 : index
    %c0_20 = arith.constant 0 : index
    %57 = vector.load %arg2[%c3, %c0_20] : memref<16x128xf32, #tpu.memory_space<vmem>>, vector<1x32xf32>
    %58 = vector.broadcast %57 : vector<1x32xf32> to vector<16x32xf32>
    %59 = arith.addf %56, %58 : vector<16x32xf32>
    %60 = arith.addf %25, %59 : vector<16x32xf32>
    %c4 = arith.constant 4 : index
    %c0_21 = arith.constant 0 : index
    %61 = vector.load %arg2[%c4, %c0_21] : memref<16x128xf32, #tpu.memory_space<vmem>>, vector<1x32xf32>
    %c5 = arith.constant 5 : index
    %c0_22 = arith.constant 0 : index
    %62 = vector.load %arg2[%c5, %c0_22] : memref<16x128xf32, #tpu.memory_space<vmem>>, vector<1x32xf32>
    %cst_23 = arith.constant dense<0.000000e+00> : vector<16xf32>
    %63 = vector.multi_reduction <add>, %60, %cst_23 [1] : vector<16x32xf32> to vector<16xf32>
    %64 = vector.shape_cast %63 : vector<16xf32> to vector<16x1xf32>
    %cst_24 = arith.constant 3.200000e+01 : f32
    %65 = vector.broadcast %cst_24 : f32 to vector<16x1xf32>
    %66 = arith.divf %64, %65 : vector<16x1xf32>
    %67 = vector.broadcast %66 : vector<16x1xf32> to vector<16x32xf32>
    %68 = arith.subf %60, %67 : vector<16x32xf32>
    %69 = arith.mulf %68, %68 : vector<16x32xf32>
    %cst_25 = arith.constant dense<0.000000e+00> : vector<16xf32>
    %70 = vector.multi_reduction <add>, %69, %cst_25 [1] : vector<16x32xf32> to vector<16xf32>
    %71 = vector.shape_cast %70 : vector<16xf32> to vector<16x1xf32>
    %cst_26 = arith.constant 3.200000e+01 : f32
    %72 = vector.broadcast %cst_26 : f32 to vector<16x1xf32>
    %73 = arith.divf %71, %72 : vector<16x1xf32>
    %74 = vector.broadcast %66 : vector<16x1xf32> to vector<16x32xf32>
    %75 = arith.subf %60, %74 : vector<16x32xf32>
    %cst_27 = arith.constant 9.99999996E-13 : f32
    %76 = vector.broadcast %cst_27 : f32 to vector<16x1xf32>
    %77 = arith.addf %73, %76 : vector<16x1xf32>
    %78 = math.rsqrt %77 : vector<16x1xf32>
    %79 = vector.broadcast %78 : vector<16x1xf32> to vector<16x32xf32>
    %80 = arith.mulf %75, %79 : vector<16x32xf32>
    %81 = vector.broadcast %61 : vector<1x32xf32> to vector<16x32xf32>
    %82 = arith.mulf %80, %81 : vector<16x32xf32>
    %83 = vector.broadcast %62 : vector<1x32xf32> to vector<16x32xf32>
    %84 = arith.addf %82, %83 : vector<16x32xf32>
    %c32_28 = arith.constant 32 : index
    %c0_29 = arith.constant 0 : index
    %85 = vector.load %arg1[%c32_28, %c0_29] : memref<208x128xbf16, #tpu.memory_space<vmem>>, vector<32x64xbf16>
    %86 = arith.truncf %84 : vector<16x32xf32> to vector<16x32xbf16>
    %cst_30 = arith.constant dense<0.000000e+00> : vector<16x64xf32>
    %87 = tpu.matmul %86, %85, %cst_30 {dimension_numbers = #tpu.dot_dimension_numbers<[1], [0], [0], [1], [0, 0, 1, 1], [], []>} : vector<16x32xbf16>, vector<32x64xbf16>, vector<16x64xf32> -> vector<16x64xf32>
    %c6 = arith.constant 6 : index
    %c0_31 = arith.constant 0 : index
    %88 = vector.load %arg2[%c6, %c0_31] : memref<16x128xf32, #tpu.memory_space<vmem>>, vector<1x64xf32>
    %89 = vector.broadcast %88 : vector<1x64xf32> to vector<16x64xf32>
    %90 = arith.addf %87, %89 : vector<16x64xf32>
    %cst_32 = arith.constant 5.000000e-01 : f32
    %91 = vector.broadcast %cst_32 : f32 to vector<16x64xf32>
    %92 = arith.mulf %91, %90 : vector<16x64xf32>
    %cst_33 = arith.constant 0.797884583 : f32
    %93 = vector.broadcast %cst_33 : f32 to vector<16x64xf32>
    %94 = arith.mulf %93, %90 : vector<16x64xf32>
    %cst_34 = arith.constant 4.471500e-02 : f32
    %95 = vector.broadcast %cst_34 : f32 to vector<16x64xf32>
    %96 = arith.mulf %95, %90 : vector<16x64xf32>
    %97 = arith.mulf %96, %90 : vector<16x64xf32>
    %cst_35 = arith.constant 1.000000e+00 : f32
    %98 = vector.broadcast %cst_35 : f32 to vector<16x64xf32>
    %99 = arith.addf %98, %97 : vector<16x64xf32>
    %100 = arith.mulf %94, %99 : vector<16x64xf32>
    %101 = math.tanh %100 : vector<16x64xf32>
    %cst_36 = arith.constant 1.000000e+00 : f32
    %102 = vector.broadcast %cst_36 : f32 to vector<16x64xf32>
    %103 = arith.addf %102, %101 : vector<16x64xf32>
    %104 = arith.mulf %92, %103 : vector<16x64xf32>
    %c64 = arith.constant 64 : index
    %c0_37 = arith.constant 0 : index
    %105 = vector.load %arg1[%c64, %c0_37] : memref<208x128xbf16, #tpu.memory_space<vmem>>, vector<64x32xbf16>
    %106 = arith.truncf %104 : vector<16x64xf32> to vector<16x64xbf16>
    %cst_38 = arith.constant dense<0.000000e+00> : vector<16x32xf32>
    %107 = tpu.matmul %106, %105, %cst_38 {dimension_numbers = #tpu.dot_dimension_numbers<[1], [0], [0], [1], [0, 0, 1, 1], [], []>} : vector<16x64xbf16>, vector<64x32xbf16>, vector<16x32xf32> -> vector<16x32xf32>
    %c7 = arith.constant 7 : index
    %c0_39 = arith.constant 0 : index
    %108 = vector.load %arg2[%c7, %c0_39] : memref<16x128xf32, #tpu.memory_space<vmem>>, vector<1x32xf32>
    %109 = vector.broadcast %108 : vector<1x32xf32> to vector<16x32xf32>
    %110 = arith.addf %107, %109 : vector<16x32xf32>
    %111 = arith.addf %84, %110 : vector<16x32xf32>
    %c8 = arith.constant 8 : index
    %c0_40 = arith.constant 0 : index
    %112 = vector.load %arg2[%c8, %c0_40] : memref<16x128xf32, #tpu.memory_space<vmem>>, vector<1x32xf32>
    %c9 = arith.constant 9 : index
    %c0_41 = arith.constant 0 : index
    %113 = vector.load %arg2[%c9, %c0_41] : memref<16x128xf32, #tpu.memory_space<vmem>>, vector<1x32xf32>
    %cst_42 = arith.constant dense<0.000000e+00> : vector<16xf32>
    %114 = vector.multi_reduction <add>, %111, %cst_42 [1] : vector<16x32xf32> to vector<16xf32>
    %115 = vector.shape_cast %114 : vector<16xf32> to vector<16x1xf32>
    %cst_43 = arith.constant 3.200000e+01 : f32
    %116 = vector.broadcast %cst_43 : f32 to vector<16x1xf32>
    %117 = arith.divf %115, %116 : vector<16x1xf32>
    %118 = vector.broadcast %117 : vector<16x1xf32> to vector<16x32xf32>
    %119 = arith.subf %111, %118 : vector<16x32xf32>
    %120 = arith.mulf %119, %119 : vector<16x32xf32>
    %cst_44 = arith.constant dense<0.000000e+00> : vector<16xf32>
    %121 = vector.multi_reduction <add>, %120, %cst_44 [1] : vector<16x32xf32> to vector<16xf32>
    %122 = vector.shape_cast %121 : vector<16xf32> to vector<16x1xf32>
    %cst_45 = arith.constant 3.200000e+01 : f32
    %123 = vector.broadcast %cst_45 : f32 to vector<16x1xf32>
    %124 = arith.divf %122, %123 : vector<16x1xf32>
    %125 = vector.broadcast %117 : vector<16x1xf32> to vector<16x32xf32>
    %126 = arith.subf %111, %125 : vector<16x32xf32>
    %cst_46 = arith.constant 9.99999996E-13 : f32
    %127 = vector.broadcast %cst_46 : f32 to vector<16x1xf32>
    %128 = arith.addf %124, %127 : vector<16x1xf32>
    %129 = math.rsqrt %128 : vector<16x1xf32>
    %130 = vector.broadcast %129 : vector<16x1xf32> to vector<16x32xf32>
    %131 = arith.mulf %126, %130 : vector<16x32xf32>
    %132 = vector.broadcast %112 : vector<1x32xf32> to vector<16x32xf32>
    %133 = arith.mulf %131, %132 : vector<16x32xf32>
    %134 = vector.broadcast %113 : vector<1x32xf32> to vector<16x32xf32>
    %135 = arith.addf %133, %134 : vector<16x32xf32>
    %c128 = arith.constant 128 : index
    %c0_47 = arith.constant 0 : index
    %136 = vector.load %arg1[%c128, %c0_47] : memref<208x128xbf16, #tpu.memory_space<vmem>>, vector<32x128xbf16>
    %137 = arith.truncf %135 : vector<16x32xf32> to vector<16x32xbf16>
    %cst_48 = arith.constant dense<0.000000e+00> : vector<16x128xf32>
    %138 = tpu.matmul %137, %136, %cst_48 {dimension_numbers = #tpu.dot_dimension_numbers<[1], [0], [0], [1], [0, 0, 1, 1], [], []>} : vector<16x32xbf16>, vector<32x128xbf16>, vector<16x128xf32> -> vector<16x128xf32>
    %c10 = arith.constant 10 : index
    %c0_49 = arith.constant 0 : index
    %139 = vector.load %arg2[%c10, %c0_49] : memref<16x128xf32, #tpu.memory_space<vmem>>, vector<1x128xf32>
    %140 = vector.broadcast %139 : vector<1x128xf32> to vector<16x128xf32>
    %141 = arith.addf %138, %140 : vector<16x128xf32>
    %142 = vector.extract_strided_slice %141 {offsets = [0, 0], sizes = [16, 4], strides = [1, 1]} : vector<16x128xf32> to vector<16x4xf32>
    %cst_50 = arith.constant dense<0xFF800000> : vector<16xf32>
    %143 = vector.multi_reduction <maximumf>, %142, %cst_50 [1] : vector<16x4xf32> to vector<16xf32>
    %144 = vector.shape_cast %143 : vector<16xf32> to vector<16x1xf32>
    %145 = vector.broadcast %144 : vector<16x1xf32> to vector<16x4xf32>
    %146 = arith.subf %142, %145 : vector<16x4xf32>
    %147 = math.exp %146 : vector<16x4xf32>
    %cst_51 = arith.constant dense<0.000000e+00> : vector<16xf32>
    %148 = vector.multi_reduction <add>, %147, %cst_51 [1] : vector<16x4xf32> to vector<16xf32>
    %149 = vector.shape_cast %148 : vector<16xf32> to vector<16x1xf32>
    %150 = tpu.reciprocal %149 {approx = true} : vector<16x1xf32> -> vector<16x1xf32>
    %151 = vector.broadcast %150 : vector<16x1xf32> to vector<16x4xf32>
    %152 = arith.mulf %147, %151 : vector<16x4xf32>
    %153 = vector.extract_strided_slice %141 {offsets = [0, 4], sizes = [16, 36], strides = [1, 1]} : vector<16x128xf32> to vector<16x36xf32>
    %c160 = arith.constant 160 : index
    %c0_52 = arith.constant 0 : index
    %154 = vector.load %arg1[%c160, %c0_52] : memref<208x128xbf16, #tpu.memory_space<vmem>>, vector<4x36xbf16>
    %155 = arith.truncf %152 : vector<16x4xf32> to vector<16x4xbf16>
    %cst_53 = arith.constant dense<0.000000e+00> : vector<16x36xf32>
    %156 = tpu.matmul %155, %154, %cst_53 {dimension_numbers = #tpu.dot_dimension_numbers<[1], [0], [0], [1], [0, 0, 1, 1], [], []>} : vector<16x4xbf16>, vector<4x36xbf16>, vector<16x36xf32> -> vector<16x36xf32>
    %157 = arith.addf %153, %156 : vector<16x36xf32>
    %158 = math.tanh %157 : vector<16x36xf32>
    %c11 = arith.constant 11 : index
    %c0_54 = arith.constant 0 : index
    %159 = vector.load %arg2[%c11, %c0_54] : memref<16x128xf32, #tpu.memory_space<vmem>>, vector<1x36xf32>
    %c12 = arith.constant 12 : index
    %c0_55 = arith.constant 0 : index
    %160 = vector.load %arg2[%c12, %c0_55] : memref<16x128xf32, #tpu.memory_space<vmem>>, vector<1x36xf32>
    %cst_56 = arith.constant dense<0.000000e+00> : vector<16xf32>
    %161 = vector.multi_reduction <add>, %158, %cst_56 [1] : vector<16x36xf32> to vector<16xf32>
    %162 = vector.shape_cast %161 : vector<16xf32> to vector<16x1xf32>
    %cst_57 = arith.constant 3.600000e+01 : f32
    %163 = vector.broadcast %cst_57 : f32 to vector<16x1xf32>
    %164 = arith.divf %162, %163 : vector<16x1xf32>
    %165 = vector.broadcast %164 : vector<16x1xf32> to vector<16x36xf32>
    %166 = arith.subf %158, %165 : vector<16x36xf32>
    %167 = arith.mulf %166, %166 : vector<16x36xf32>
    %cst_58 = arith.constant dense<0.000000e+00> : vector<16xf32>
    %168 = vector.multi_reduction <add>, %167, %cst_58 [1] : vector<16x36xf32> to vector<16xf32>
    %169 = vector.shape_cast %168 : vector<16xf32> to vector<16x1xf32>
    %cst_59 = arith.constant 3.600000e+01 : f32
    %170 = vector.broadcast %cst_59 : f32 to vector<16x1xf32>
    %171 = arith.divf %169, %170 : vector<16x1xf32>
    %172 = vector.broadcast %164 : vector<16x1xf32> to vector<16x36xf32>
    %173 = arith.subf %158, %172 : vector<16x36xf32>
    %cst_60 = arith.constant 9.99999974E-6 : f32
    %174 = vector.broadcast %cst_60 : f32 to vector<16x1xf32>
    %175 = arith.addf %171, %174 : vector<16x1xf32>
    %176 = math.rsqrt %175 : vector<16x1xf32>
    %177 = vector.broadcast %176 : vector<16x1xf32> to vector<16x36xf32>
    %178 = arith.mulf %173, %177 : vector<16x36xf32>
    %179 = vector.broadcast %159 : vector<1x36xf32> to vector<16x36xf32>
    %180 = arith.mulf %178, %179 : vector<16x36xf32>
    %181 = vector.broadcast %160 : vector<1x36xf32> to vector<16x36xf32>
    %182 = arith.addf %180, %181 : vector<16x36xf32>
    %c168 = arith.constant 168 : index
    %c0_61 = arith.constant 0 : index
    %183 = vector.load %arg1[%c168, %c0_61] : memref<208x128xbf16, #tpu.memory_space<vmem>>, vector<36x128xbf16>
    %184 = arith.truncf %182 : vector<16x36xf32> to vector<16x36xbf16>
    %cst_62 = arith.constant dense<0.000000e+00> : vector<16x128xf32>
    %185 = tpu.matmul %184, %183, %cst_62 {dimension_numbers = #tpu.dot_dimension_numbers<[1], [0], [0], [1], [0, 0, 1, 1], [], []>} : vector<16x36xbf16>, vector<36x128xbf16>, vector<16x128xf32> -> vector<16x128xf32>
    %c13 = arith.constant 13 : index
    %c0_63 = arith.constant 0 : index
    %186 = vector.load %arg2[%c13, %c0_63] : memref<16x128xf32, #tpu.memory_space<vmem>>, vector<1x128xf32>
    %187 = vector.broadcast %186 : vector<1x128xf32> to vector<16x128xf32>
    %188 = arith.addf %185, %187 : vector<16x128xf32>
    %c14 = arith.constant 14 : index
    %c0_64 = arith.constant 0 : index
    %189 = vector.load %arg2[%c14, %c0_64] : memref<16x128xf32, #tpu.memory_space<vmem>>, vector<1x128xf32>
    %190 = vector.broadcast %189 : vector<1x128xf32> to vector<16x128xf32>
    %191 = arith.mulf %141, %190 : vector<16x128xf32>
    %c0_65 = arith.constant 0 : index
    %c0_66 = arith.constant 0 : index
    %c0_67 = arith.constant 0 : index
    %192 = vector.load %arg3[%c0_65, %c0_66, %c0_67] : memref<2x16x128xf32, #tpu.memory_space<vmem>>, vector<1x16x128xf32>
    %193 = vector.shape_cast %192 : vector<1x16x128xf32> to vector<16x128xf32>
    %194 = vector.shape_cast %191 : vector<16x128xf32> to vector<1x16x128xf32>
    tpu.vector_store %arg3[%c0_65, %c0_66, %c0_67], %194 {strides = array<i32>} : memref<2x16x128xf32, #tpu.memory_space<vmem>>, vector<1x16x128xf32>,
    %c1_68 = arith.constant 1 : index
    %c0_69 = arith.constant 0 : index
    %c0_70 = arith.constant 0 : index
    %195 = vector.load %arg3[%c1_68, %c0_69, %c0_70] : memref<2x16x128xf32, #tpu.memory_space<vmem>>, vector<1x16x128xf32>
    %196 = vector.shape_cast %195 : vector<1x16x128xf32> to vector<16x128xf32>
    %197 = vector.shape_cast %188 : vector<16x128xf32> to vector<1x16x128xf32>
    tpu.vector_store %arg3[%c1_68, %c0_69, %c0_70], %197 {strides = array<i32>} : memref<2x16x128xf32, #tpu.memory_space<vmem>>, vector<1x16x128xf32>,
    return
  }
}

</mosaic_0001>

<llo_original>
// kernel: bert_span_forward.1
$region0: #{bert_span_forward.1}
  #allocation0 [shape = 'u32[]', space=smem, size = 0x4, offset = 0x4, fixed_abs, tag = 'smem constant byte address 0x4 - core index']
  #allocation1 [shape = 'u32[72,128]{1,0:T(1,128)}', space=vmem, size = 0x9000, scoped, tag = 'internal scratch']
  %s0 = inlined_call_operand.vmem [shape: f32[16,48], index: 0, kind: input, shape index: {}]
  %s1 = inlined_call_operand.vmem [shape: bf16[208,128], index: 1, kind: input, shape index: {}]
  %s2 = inlined_call_operand.vmem [shape: f32[16,128], index: 2, kind: input, shape index: {}]
  %s3 = inlined_call_operand.vmem [shape: f32[2,16,128], index: 3, kind: output, shape index: {}]
  %s4 = sld [smem:[#allocation0]]
  $region22: #{bert_span_forward.1} parent=0
    _
  %s6 = ssub.s32 1, %s4
  %s7 = scalar_select 0, %s6, %s4
  // Predicated region
  $region2: #{bert_span_forward.1} parent=0 // pred_check
    _
  $region3: #{bert_span_forward.1} parent=0 // pred_check_branch
    %9 = sbr.rel (0) target = $region5
  $region4: #{bert_span_forward.1} parent=0 // pred_region
    _
  $region5: #{bert_span_forward.1} parent=0 // pred_fallthru
    _
  // Predicated region
  $region6: #{bert_span_forward.1} parent=0 // pred_check
    _
  $region7: #{bert_span_forward.1} parent=0 // pred_check_branch
    %11 = sbr.rel (0) target = $region9
  $region8: #{bert_span_forward.1} parent=0 // pred_region
    _
  $region9: #{bert_span_forward.1} parent=0 // pred_fallthru
    _
  // Predicated region
  $region10: #{bert_span_forward.1} parent=0 // pred_check
    _
  $region11: #{bert_span_forward.1} parent=0 // pred_check_branch
    %13 = sbr.rel (0) target = $region13
  $region12: #{bert_span_forward.1} parent=0 // pred_region
    _
  $region13: #{bert_span_forward.1} parent=0 // pred_fallthru
    _
  %v15 = vld [vmem:[%s0] sm:$0xff]
  %v16 = vld [vmem:[%s0 + $0x8] sm:$0xff]
  %v17 = vld [vmem:[%s2] sm:$0x1]
  %v18 = vld [vmem:[%s2 + $0x1] sm:$0x1]
  %vm19 = vcmask 261120
  %v20 = vsel %vm19, %v15, 0.0
  %21 = vadd.xlane.f32.xlu0 %v20
  %v22 = vpop.xlane.xlu0 %21
  %v23 = vsel %vm19, %v16, 0.0
  %24 = vadd.xlane.f32.xlu0 %v23
  %v25 = vpop.xlane.xlu0 %24
  %v26 = vrcp.pop 32.0
  %v27 = vmul.f32 32.0, %v26
  %v28 = vsub.f32 1.0, %v27
  %v29 = vmul.f32 %v26, %v28
  %v30 = vadd.f32 %v26, %v29
  %vm31 = vweird.f32 %v26
  %v32 = vsel %vm31, %v26, %v30
  %v33 = vmul.f32 %v22, %v32
  %v34 = vmul.f32 %v25, %v32
  %v35 = vsub.f32 %v15, %v33
  %v36 = vsub.f32 %v16, %v34
  %v37 = vmul.f32 %v35, %v35
  %v38 = vmul.f32 %v36, %v36
  %v39 = vsel %vm19, %v37, 0.0
  %40 = vadd.xlane.f32.xlu0 %v39
  %v41 = vpop.xlane.xlu0 %40
  %v42 = vsel %vm19, %v38, 0.0
  %43 = vadd.xlane.f32.xlu0 %v42
  %v44 = vpop.xlane.xlu0 %43
  %v45 = vmul.f32 %v41, %v32
  %v46 = vmul.f32 %v44, %v32
  %v47 = vadd.f32 %v45, 1e-12
  %v48 = vadd.f32 %v46, 1e-12
  %v49 = vrsqrt.pop %v47
  %v50 = vmul.f32 %v49, %v47
  %v51 = vmul.f32 %v50, %v49
  %v52 = vmul.f32 0.5, %v51
  %v53 = vsub.f32 1.5, %v52
  %v54 = vmul.f32 %v49, %v53
  %vm55 = vweird.f32 %v47
  %vm56 = vweird.f32 %v49
  %vm57 = vmor %vm55, %vm56
  %v58 = vsel %vm57, %v49, %v54
  %v59 = vrsqrt.pop %v48
  %v60 = vmul.f32 %v59, %v48
  %v61 = vmul.f32 %v60, %v59
  %v62 = vmul.f32 0.5, %v61
  %v63 = vsub.f32 1.5, %v62
  %v64 = vmul.f32 %v59, %v63
  %vm65 = vweird.f32 %v48
  %vm66 = vweird.f32 %v59
  %vm67 = vmor %vm65, %vm66
  %v68 = vsel %vm67, %v59, %v64
  %v69 = vmul.f32 %v35, %v58
  %v70 = vmul.f32 %v36, %v68
  %v71 = vperm.slane %v17, 0
  %v72 = vmul.f32 %v69, %v71
  %v73 = vmul.f32 %v70, %v71
  %v74 = vperm.slane %v18, 0
  %v75 = vadd.f32 %v72, %v74
  %v76 = vadd.f32 %v73, %v74
  %v77 = vld [vmem:[%s1] sm:$0xf]
  %v78 = vld [vmem:[%s1 + $0x4] sm:$0xf]
  %v79 = vld [vmem:[%s1 + $0x8] sm:$0xf]
  %v80 = vld [vmem:[%s1 + $0xc] sm:$0xf]
  %v81 = vpack.c.bf16 %v76, %v75
  %v82 = vld [vmem:[%s2 + $0x2] sm:$0x1]
  %v83 = vperm.slane %v82, 0
  %v88 = vunpack.c.l.b16 %v77
  %v89 = vunpack.c.l.b16 %v78
  %v90 = vunpack.c.l.b16 %v79
  %v91 = vunpack.c.l.b16 %v80
  %v92 = vpack.c.b16 %v89, %v88
  %v93 = vpack.c.b16 %v91, %v90
  %v97 = vsel %vm19, %v81, 0
  %99 = vmatpush.bf16.msra.mxu0 0
  %100 = vmatpush.bf16.msra.mxu0 0
  %101 = vmatpush.bf16.msra.mxu0 0
  %102 = vmatpush.bf16.msra.mxu0 0
  %103 = vmatpush.bf16.msra.mxu0 0
  %104 = vmatpush.bf16.msra.mxu0 0
  %105 = vmatpush.bf16.msra.mxu0 %v93
  %106 = vmatpush.bf16.msra.mxu0 %v92
  %107 = vmatmul.bf16.gmra.mxu0 %v97
  %v108 = vpop.f32.mrf.mxu0
  %v109 = vadd.f32 %v83, %v108
  %v110 = vpop.f32.mrf.mxu0
  %v111 = vadd.f32 %v83, %v110
  %112 = vdwg.mxu0
  %v113 = vpack.c.bf16 %v111, %v109
  %115 = vrot.lane.b32.xlu0 %v113, 96
  %v116 = vpop.permute.xlu0 %115
  %v118 = vsel %vm19, %v113, 0
  %v121 = vsel %vm19, %v116, 0
  %123 = vmatpush.bf16.xpose.msra.mxu0 0
  %124 = vmatpush.bf16.xpose.msra.mxu0 0
  %125 = vmatpush.bf16.xpose.msra.mxu0 0
  %126 = vmatpush.bf16.xpose.msra.mxu0 0
  %127 = vmatpush.bf16.xpose.msra.mxu0 0
  %128 = vmatpush.bf16.xpose.msra.mxu0 0
  %129 = vmatpush.bf16.xpose.msra.mxu0 0
  %130 = vmatpush.bf16.xpose.msra.mxu0 %v121
  %131 = vmatmul.bf16.gmra.mxu0 %v118
  %v132 = vpop.f32.mrf.mxu0
  %v133 = vadd.f32 0.0, %v132
  %v134 = vpop.f32.mrf.mxu0
  %v135 = vadd.f32 0.0, %v134
  %136 = vdwg.mxu0
  %v137 = vmul.f32 %v133, 0.17677669
  %v138 = vmul.f32 %v135, 0.17677669
  %141 = vrot.lane.b32.xlu0 %v15, 96
  %v142 = vpop.permute.xlu0 %141
  %143 = vrot.lane.b32.xlu0 %v16, 96
  %v144 = vpop.permute.xlu0 %143
  %v147 = vadd.f32 %v137, %v142
  %v148 = vadd.f32 %v138, %v144
  %vm149 = vcmask 130048
  %v150 = vsel %vm149, %v147, -inf
  %151 = vmax.xlane.f32.xlu0 %v150
  %v152 = vpop.xlane.xlu0 %151
  %v153 = vsel %vm149, %v148, -inf
  %154 = vmax.xlane.f32.xlu0 %v153
  %v155 = vpop.xlane.xlu0 %154
  %v156 = vsub.f32 %v147, %v152
  %v157 = vsub.f32 %v148, %v155
  %v158 = vmul.f32 %v156, 1.442695
  %v159 = vpow.pop %v158
  %v160 = vmul.f32 %v157, 1.442695
  %v161 = vpow.pop %v160
  %v162 = vsel %vm149, %v159, 0.0
  %163 = vadd.xlane.f32.xlu0 %v162
  %v164 = vpop.xlane.xlu0 %163
  %v165 = vsel %vm149, %v161, 0.0
  %166 = vadd.xlane.f32.xlu0 %v165
  %v167 = vpop.xlane.xlu0 %166
  %v168 = vrcp.pop %v164
  %v169 = vrcp.pop %v167
  %v170 = vmul.f32 %v159, %v168
  %v171 = vmul.f32 %v161, %v169
  %v172 = vpack.c.bf16 %v171, %v170
  %173 = vrot.lane.b32.xlu0 %v113, 64
  %v174 = vpop.permute.xlu0 %173
  %v177 = vsel %vm149, %v172, 0
  %179 = vmatpush.bf16.msra.mxu0 0
  %180 = vmatpush.bf16.msra.mxu0 0
  %181 = vmatpush.bf16.msra.mxu0 0
  %182 = vmatpush.bf16.msra.mxu0 0
  %183 = vmatpush.bf16.msra.mxu0 0
  %184 = vmatpush.bf16.msra.mxu0 0
  %185 = vmatpush.bf16.msra.mxu0 0
  %186 = vmatpush.bf16.msra.mxu0 %v174
  %187 = vmatmul.bf16.gmra.mxu0 %v177
  %v188 = vpop.f32.mrf.mxu0
  %v189 = vadd.f32 0.0, %v188
  %v190 = vpop.f32.mrf.mxu0
  %v191 = vadd.f32 0.0, %v190
  %192 = vdwg.mxu0
  %v193 = vpack.c.bf16 %v191, %v189
  %v194 = vld [vmem:[%s2 + $0x3] sm:$0x1]
  %v195 = vperm.slane %v194, 0
  %196 = vrot.lane.b32.xlu0 %v92, 32
  %v197 = vpop.permute.xlu0 %196
  %198 = vrot.lane.b32.xlu0 %v93, 32
  %v199 = vpop.permute.xlu0 %198
  %v203 = vsel %vm19, %v193, 0
  %205 = vmatpush.bf16.msra.mxu0 0
  %206 = vmatpush.bf16.msra.mxu0 0
  %207 = vmatpush.bf16.msra.mxu0 0
  %208 = vmatpush.bf16.msra.mxu0 0
  %209 = vmatpush.bf16.msra.mxu0 0
  %210 = vmatpush.bf16.msra.mxu0 0
  %211 = vmatpush.bf16.msra.mxu0 %v199
  %212 = vmatpush.bf16.msra.mxu0 %v197
  %213 = vmatmul.bf16.gmra.mxu0 %v203
  %v214 = vpop.f32.mrf.mxu0
  %v215 = vadd.f32 %v195, %v214
  %v216 = vpop.f32.mrf.mxu0
  %v217 = vadd.f32 %v195, %v216
  %218 = vdwg.mxu0
  %v219 = vadd.f32 %v75, %v215
  %v220 = vadd.f32 %v76, %v217
  %v221 = vld [vmem:[%s2 + $0x4] sm:$0x1]
  %v222 = vld [vmem:[%s2 + $0x5] sm:$0x1]
  %v223 = vsel %vm19, %v219, 0.0
  %224 = vadd.xlane.f32.xlu0 %v223
  %v225 = vpop.xlane.xlu0 %224
  %v226 = vsel %vm19, %v220, 0.0
  %227 = vadd.xlane.f32.xlu0 %v226
  %v228 = vpop.xlane.xlu0 %227
  %v229 = vmul.f32 %v225, %v32
  %v230 = vmul.f32 %v228, %v32
  %v231 = vsub.f32 %v219, %v229
  %v232 = vsub.f32 %v220, %v230
  %v233 = vmul.f32 %v231, %v231
  %v234 = vmul.f32 %v232, %v232
  %v235 = vsel %vm19, %v233, 0.0
  %236 = vadd.xlane.f32.xlu0 %v235
  %v237 = vpop.xlane.xlu0 %236
  %v238 = vsel %vm19, %v234, 0.0
  %239 = vadd.xlane.f32.xlu0 %v238
  %v240 = vpop.xlane.xlu0 %239
  %v241 = vmul.f32 %v237, %v32
  %v242 = vmul.f32 %v240, %v32
  %v243 = vadd.f32 %v241, 1e-12
  %v244 = vadd.f32 %v242, 1e-12
  %v245 = vrsqrt.pop %v243
  %v246 = vmul.f32 %v245, %v243
  %v247 = vmul.f32 %v246, %v245
  %v248 = vmul.f32 0.5, %v247
  %v249 = vsub.f32 1.5, %v248
  %v250 = vmul.f32 %v245, %v249
  %vm251 = vweird.f32 %v243
  %vm252 = vweird.f32 %v245
  %vm253 = vmor %vm251, %vm252
  %v254 = vsel %vm253, %v245, %v250
  %v255 = vrsqrt.pop %v244
  %v256 = vmul.f32 %v255, %v244
  %v257 = vmul.f32 %v256, %v255
  %v258 = vmul.f32 0.5, %v257
  %v259 = vsub.f32 1.5, %v258
  %v260 = vmul.f32 %v255, %v259
  %vm261 = vweird.f32 %v244
  %vm262 = vweird.f32 %v255
  %vm263 = vmor %vm261, %vm262
  %v264 = vsel %vm263, %v255, %v260
  %v265 = vmul.f32 %v231, %v254
  %v266 = vmul.f32 %v232, %v264
  %v267 = vperm.slane %v221, 0
  %v268 = vmul.f32 %v265, %v267
  %v269 = vmul.f32 %v266, %v267
  %v270 = vperm.slane %v222, 0
  %v271 = vadd.f32 %v268, %v270
  %v272 = vadd.f32 %v269, %v270
  %v273 = vld [vmem:[%s1 + $0x10] sm:$0xf]
  %v274 = vld [vmem:[%s1 + $0x14] sm:$0xf]
  %v275 = vld [vmem:[%s1 + $0x18] sm:$0xf]
  %v276 = vld [vmem:[%s1 + $0x1c] sm:$0xf]
  %v277 = vpack.c.bf16 %v272, %v271
  %v278 = vld [vmem:[%s2 + $0x6] sm:$0x1]
  %v279 = vperm.slane %v278, 0
  %v284 = vunpack.c.l.b16 %v273
  %v285 = vunpack.c.l.b16 %v274
  %v286 = vunpack.c.l.b16 %v275
  %v287 = vunpack.c.l.b16 %v276
  %v288 = vpack.c.b16 %v285, %v284
  %v289 = vpack.c.b16 %v287, %v286
  %v293 = vsel %vm19, %v277, 0
  %295 = vmatpush.bf16.msra.mxu0 0
  %296 = vmatpush.bf16.msra.mxu0 0
  %297 = vmatpush.bf16.msra.mxu0 0
  %298 = vmatpush.bf16.msra.mxu0 0
  %299 = vmatpush.bf16.msra.mxu0 0
  %300 = vmatpush.bf16.msra.mxu0 0
  %301 = vmatpush.bf16.msra.mxu0 %v289
  %302 = vmatpush.bf16.msra.mxu0 %v288
  %303 = vmatmul.bf16.gmra.mxu0 %v293
  %v304 = vpop.f32.mrf.mxu0
  %v305 = vadd.f32 %v279, %v304
  %v306 = vpop.f32.mrf.mxu0
  %v307 = vadd.f32 %v279, %v306
  %308 = vdwg.mxu0
  %v309 = vmul.f32 %v305, 0.5
  %v310 = vmul.f32 %v307, 0.5
  %v311 = vmul.f32 %v305, 0.7978846
  %v312 = vmul.f32 %v307, 0.7978846
  %v313 = vmul.f32 %v305, 0.044715
  %v314 = vmul.f32 %v307, 0.044715
  %v315 = vmul.f32 %v313, %v305
  %v316 = vmul.f32 %v314, %v307
  %v317 = vadd.f32 %v315, 1.0
  %v318 = vadd.f32 %v316, 1.0
  %v319 = vmul.f32 %v311, %v317
  %v320 = vmul.f32 %v312, %v318
  %v321 = vtanh.pop %v319
  %v322 = vtanh.pop %v320
  %v323 = vadd.f32 %v321, 1.0
  %v324 = vadd.f32 %v322, 1.0
  %v325 = vmul.f32 %v309, %v323
  %v326 = vmul.f32 %v310, %v324
  %v327 = vld [vmem:[%s1 + $0x20] sm:$0xf]
  %v328 = vld [vmem:[%s1 + $0x24] sm:$0xf]
  %v329 = vld [vmem:[%s1 + $0x28] sm:$0xf]
  %v330 = vld [vmem:[%s1 + $0x2c] sm:$0xf]
  %v331 = vld [vmem:[%s1 + $0x30] sm:$0xf]
  %v332 = vld [vmem:[%s1 + $0x34] sm:$0xf]
  %v333 = vld [vmem:[%s1 + $0x38] sm:$0xf]
  %v334 = vld [vmem:[%s1 + $0x3c] sm:$0xf]
  %v335 = vpack.c.bf16 %v326, %v325
  %v336 = vld [vmem:[%s2 + $0x7] sm:$0x1]
  %v337 = vperm.slane %v336, 0
  %v346 = vunpack.c.l.b16 %v327
  %v347 = vunpack.c.l.b16 %v328
  %v348 = vunpack.c.l.b16 %v329
  %v349 = vunpack.c.l.b16 %v330
  %v350 = vunpack.c.l.b16 %v331
  %v351 = vunpack.c.l.b16 %v332
  %v352 = vunpack.c.l.b16 %v333
  %v353 = vunpack.c.l.b16 %v334
  %v354 = vpack.c.b16 %v347, %v346
  %v355 = vpack.c.b16 %v349, %v348
  %v356 = vpack.c.b16 %v351, %v350
  %v357 = vpack.c.b16 %v353, %v352
  %vm362 = vcmask 523264
  %v364 = vsel %vm362, %v335, 0
  %366 = vmatpush.bf16.msra.mxu0 0
  %367 = vmatpush.bf16.msra.mxu0 0
  %368 = vmatpush.bf16.msra.mxu0 0
  %369 = vmatpush.bf16.msra.mxu0 0
  %370 = vmatpush.bf16.msra.mxu0 %v357
  %371 = vmatpush.bf16.msra.mxu0 %v356
  %372 = vmatpush.bf16.msra.mxu0 %v355
  %373 = vmatpush.bf16.msra.mxu0 %v354
  %374 = vmatmul.bf16.gmra.mxu0 %v364
  %v375 = vpop.f32.mrf.mxu0
  %v376 = vadd.f32 %v337, %v375
  %v377 = vpop.f32.mrf.mxu0
  %v378 = vadd.f32 %v337, %v377
  %379 = vdwg.mxu0
  %v380 = vadd.f32 %v271, %v376
  %v381 = vadd.f32 %v272, %v378
  %v382 = vld [vmem:[%s2 + $0x8] sm:$0x1]
  %v383 = vld [vmem:[%s2 + $0x9] sm:$0x1]
  %v384 = vsel %vm19, %v380, 0.0
  %385 = vadd.xlane.f32.xlu0 %v384
  %v386 = vpop.xlane.xlu0 %385
  %v387 = vsel %vm19, %v381, 0.0
  %388 = vadd.xlane.f32.xlu0 %v387
  %v389 = vpop.xlane.xlu0 %388
  %v390 = vmul.f32 %v386, %v32
  %v391 = vmul.f32 %v389, %v32
  %v392 = vsub.f32 %v380, %v390
  %v393 = vsub.f32 %v381, %v391
  %v394 = vmul.f32 %v392, %v392
  %v395 = vmul.f32 %v393, %v393
  %v396 = vsel %vm19, %v394, 0.0
  %397 = vadd.xlane.f32.xlu0 %v396
  %v398 = vpop.xlane.xlu0 %397
  %v399 = vsel %vm19, %v395, 0.0
  %400 = vadd.xlane.f32.xlu0 %v399
  %v401 = vpop.xlane.xlu0 %400
  %v402 = vmul.f32 %v398, %v32
  %v403 = vmul.f32 %v401, %v32
  %v404 = vadd.f32 %v402, 1e-12
  %v405 = vadd.f32 %v403, 1e-12
  %v406 = vrsqrt.pop %v404
  %v407 = vmul.f32 %v406, %v404
  %v408 = vmul.f32 %v407, %v406
  %v409 = vmul.f32 0.5, %v408
  %v410 = vsub.f32 1.5, %v409
  %v411 = vmul.f32 %v406, %v410
  %vm412 = vweird.f32 %v404
  %vm413 = vweird.f32 %v406
  %vm414 = vmor %vm412, %vm413
  %v415 = vsel %vm414, %v406, %v411
  %v416 = vrsqrt.pop %v405
  %v417 = vmul.f32 %v416, %v405
  %v418 = vmul.f32 %v417, %v416
  %v419 = vmul.f32 0.5, %v418
  %v420 = vsub.f32 1.5, %v419
  %v421 = vmul.f32 %v416, %v420
  %vm422 = vweird.f32 %v405
  %vm423 = vweird.f32 %v416
  %vm424 = vmor %vm422, %vm423
  %v425 = vsel %vm424, %v416, %v421
  %v426 = vmul.f32 %v392, %v415
  %v427 = vmul.f32 %v393, %v425
  %v428 = vperm.slane %v382, 0
  %v429 = vmul.f32 %v426, %v428
  %v430 = vmul.f32 %v427, %v428
  %v431 = vperm.slane %v383, 0
  %v432 = vadd.f32 %v429, %v431
  %v433 = vadd.f32 %v430, %v431
  %v434 = vld [vmem:[%s1 + $0x40] sm:$0xf]
  %v435 = vld [vmem:[%s1 + $0x44] sm:$0xf]
  %v436 = vld [vmem:[%s1 + $0x48] sm:$0xf]
  %v437 = vld [vmem:[%s1 + $0x4c] sm:$0xf]
  %v438 = vpack.c.bf16 %v433, %v432
  %v439 = vld [vmem:[%s2 + $0xa] sm:$0x1]
  %v440 = vperm.slane %v439, 0
  %v445 = vunpack.c.l.b16 %v434
  %v446 = vunpack.c.l.b16 %v435
  %v447 = vunpack.c.l.b16 %v436
  %v448 = vunpack.c.l.b16 %v437
  %v449 = vpack.c.b16 %v446, %v445
  %v450 = vpack.c.b16 %v448, %v447
  %v454 = vsel %vm19, %v438, 0
  %456 = vmatpush.bf16.msra.mxu0 0
  %457 = vmatpush.bf16.msra.mxu0 0
  %458 = vmatpush.bf16.msra.mxu0 0
  %459 = vmatpush.bf16.msra.mxu0 0
  %460 = vmatpush.bf16.msra.mxu0 0
  %461 = vmatpush.bf16.msra.mxu0 0
  %462 = vmatpush.bf16.msra.mxu0 %v450
  %463 = vmatpush.bf16.msra.mxu0 %v449
  %464 = vmatmul.bf16.gmra.mxu0 %v454
  %v465 = vpop.f32.mrf.mxu0
  %v466 = vadd.f32 %v440, %v465
  %v467 = vpop.f32.mrf.mxu0
  %v468 = vadd.f32 %v440, %v467
  %469 = vdwg.mxu0
  %vm470 = vcmask 31744
  %v471 = vsel %vm470, %v466, -inf
  %472 = vmax.xlane.f32.xlu0 %v471
  %v473 = vpop.xlane.xlu0 %472
  %v474 = vsel %vm470, %v468, -inf
  %475 = vmax.xlane.f32.xlu0 %v474
  %v476 = vpop.xlane.xlu0 %475
  %v477 = vsub.f32 %v466, %v473
  %v478 = vsub.f32 %v468, %v476
  %v479 = vmul.f32 %v477, 1.442695
  %v480 = vpow.pop %v479
  %v481 = vmul.f32 %v478, 1.442695
  %v482 = vpow.pop %v481
  %v483 = vsel %vm470, %v480, 0.0
  %484 = vadd.xlane.f32.xlu0 %v483
  %v485 = vpop.xlane.xlu0 %484
  %v486 = vsel %vm470, %v482, 0.0
  %487 = vadd.xlane.f32.xlu0 %v486
  %v488 = vpop.xlane.xlu0 %487
  %v489 = vrcp.pop %v485
  %v490 = vrcp.pop %v488
  %v491 = vmul.f32 %v480, %v489
  %v492 = vmul.f32 %v482, %v490
  %v493 = vld [vmem:[%s1 + $0x50] sm:$0x3]
  %v494 = vpack.c.bf16 %v492, %v491
  %v496 = vsel %vm470, %v494, 0
  %vm498 = vcmask 1041408
  %v500 = vsel %vm498, %v493, 0
  %502 = vmatpush.bf16.msra.mxu0 0
  %503 = vmatpush.bf16.msra.mxu0 0
  %504 = vmatpush.bf16.msra.mxu0 0
  %505 = vmatpush.bf16.msra.mxu0 0
  %506 = vmatpush.bf16.msra.mxu0 0
  %507 = vmatpush.bf16.msra.mxu0 0
  %508 = vmatpush.bf16.msra.mxu0 0
  %509 = vmatpush.bf16.msra.mxu0 %v500
  %510 = vmatmul.bf16.gmra.mxu0 %v496
  %v511 = vpop.f32.mrf.mxu0
  %v512 = vadd.f32 0.0, %v511
  %v513 = vpop.f32.mrf.mxu0
  %v514 = vadd.f32 0.0, %v513
  %515 = vdwg.mxu0
  %518 = vrot.lane.b32.xlu0 %v512, 4
  %v519 = vpop.permute.xlu0 %518
  %520 = vrot.lane.b32.xlu0 %v514, 4
  %v521 = vpop.permute.xlu0 %520
  %v524 = vadd.f32 %v466, %v519
  %v525 = vadd.f32 %v468, %v521
  %v526 = vtanh.pop %v524
  %v527 = vtanh.pop %v525
  %v528 = vld [vmem:[%s2 + $0xb] sm:$0x1]
  %v529 = vld [vmem:[%s2 + $0xc] sm:$0x1]
  %532 = vrot.lane.b32.xlu0 %v526, 124
  %v533 = vpop.permute.xlu0 %532
  %534 = vrot.lane.b32.xlu0 %v527, 124
  %v535 = vpop.permute.xlu0 %534
  %vm538 = vcmask 293888
  %v539 = vsel %vm538, %v533, 0.0
  %540 = vadd.xlane.f32.xlu0 %v539
  %v541 = vpop.xlane.xlu0 %540
  %v542 = vsel %vm538, %v535, 0.0
  %543 = vadd.xlane.f32.xlu0 %v542
  %v544 = vpop.xlane.xlu0 %543
  %v545 = vrcp.pop 36.0
  %v546 = vmul.f32 36.0, %v545
  %v547 = vsub.f32 1.0, %v546
  %v548 = vmul.f32 %v545, %v547
  %v549 = vadd.f32 %v545, %v548
  %vm550 = vweird.f32 %v545
  %v551 = vsel %vm550, %v545, %v549
  %v552 = vmul.f32 %v541, %v551
  %v553 = vmul.f32 %v544, %v551
  %v554 = vsub.f32 %v526, %v552
  %v555 = vsub.f32 %v527, %v553
  %v556 = vmul.f32 %v554, %v554
  %v557 = vmul.f32 %v555, %v555
  %560 = vrot.lane.b32.xlu0 %v556, 124
  %v561 = vpop.permute.xlu0 %560
  %562 = vrot.lane.b32.xlu0 %v557, 124
  %v563 = vpop.permute.xlu0 %562
  %v566 = vsel %vm538, %v561, 0.0
  %567 = vadd.xlane.f32.xlu0 %v566
  %v568 = vpop.xlane.xlu0 %567
  %v569 = vsel %vm538, %v563, 0.0
  %570 = vadd.xlane.f32.xlu0 %v569
  %v571 = vpop.xlane.xlu0 %570
  %v572 = vmul.f32 %v568, %v551
  %v573 = vmul.f32 %v571, %v551
  %v574 = vadd.f32 %v572, 1e-05
  %v575 = vadd.f32 %v573, 1e-05
  %v576 = vrsqrt.pop %v574
  %v577 = vmul.f32 %v576, %v574
  %v578 = vmul.f32 %v577, %v576
  %v579 = vmul.f32 0.5, %v578
  %v580 = vsub.f32 1.5, %v579
  %v581 = vmul.f32 %v576, %v580
  %vm582 = vweird.f32 %v574
  %vm583 = vweird.f32 %v576
  %vm584 = vmor %vm582, %vm583
  %v585 = vsel %vm584, %v576, %v581
  %v586 = vrsqrt.pop %v575
  %v587 = vmul.f32 %v586, %v575
  %v588 = vmul.f32 %v587, %v586
  %v589 = vmul.f32 0.5, %v588
  %v590 = vsub.f32 1.5, %v589
  %v591 = vmul.f32 %v586, %v590
  %vm592 = vweird.f32 %v575
  %vm593 = vweird.f32 %v586
  %vm594 = vmor %vm592, %vm593
  %v595 = vsel %vm594, %v586, %v591
  %v596 = vmul.f32 %v554, %v585
  %v597 = vmul.f32 %v555, %v595
  %v598 = vperm.slane %v528, 0
  %600 = vrot.lane.b32.xlu0 %v598, 4
  %v601 = vpop.permute.xlu0 %600
  %v603 = vmul.f32 %v596, %v601
  %v604 = vmul.f32 %v597, %v601
  %v605 = vperm.slane %v529, 0
  %607 = vrot.lane.b32.xlu0 %v605, 4
  %v608 = vpop.permute.xlu0 %607
  %v610 = vadd.f32 %v603, %v608
  %v611 = vadd.f32 %v604, %v608
  %v612 = vld [vmem:[%s1 + $0x54] sm:$0xf]
  %v613 = vld [vmem:[%s1 + $0x58] sm:$0xf]
  %v614 = vld [vmem:[%s1 + $0x5c] sm:$0xf]
  %v615 = vld [vmem:[%s1 + $0x60] sm:$0xf]
  %v616 = vld [vmem:[%s1 + $0x64] sm:$0x3]
  %v617 = vpack.c.bf16 %v611, %v610
  %v618 = vld [vmem:[%s2 + $0xd] sm:$0x1]
  %v619 = vperm.slane %v618, 0
  %621 = vrot.lane.b32.xlu0 %v617, 124
  %v622 = vpop.permute.xlu0 %621
  %v628 = vunpack.c.l.b16 %v612
  %v629 = vunpack.c.l.b16 %v613
  %v630 = vunpack.c.l.b16 %v614
  %v631 = vunpack.c.l.b16 %v615
  %v632 = vunpack.c.l.b16 %v616
  %v633 = vpack.c.b16 %v629, %v628
  %v634 = vpack.c.b16 %v631, %v630
  %v635 = vpack.c.b16 %v632, %v632
  %v639 = vsel %vm538, %v622, 0
  %v642 = vsel %vm498, %v635, 0
  %644 = vmatpush.bf16.msra.mxu0 0
  %645 = vmatpush.bf16.msra.mxu0 0
  %646 = vmatpush.bf16.msra.mxu0 0
  %647 = vmatpush.bf16.msra.mxu0 0
  %648 = vmatpush.bf16.msra.mxu0 0
  %649 = vmatpush.bf16.msra.mxu0 %v642
  %650 = vmatpush.bf16.msra.mxu0 %v634
  %651 = vmatpush.bf16.msra.mxu0 %v633
  %652 = vmatmul.bf16.gmra.mxu0 %v639
  %v653 = vpop.f32.mrf.mxu0
  %v654 = vadd.f32 %v619, %v653
  %v655 = vpop.f32.mrf.mxu0
  %v656 = vadd.f32 %v619, %v655
  %657 = vdwg.mxu0
  %v658 = vld [vmem:[%s2 + $0xe] sm:$0x1]
  %v659 = vperm.slane %v658, 0
  %v660 = vmul.f32 %v466, %v659
  %v661 = vmul.f32 %v468, %v659
  %662 = vst [vmem:[%s3] sm:$0xff] %v660
  %663 = vst [vmem:[%s3 + $0x8] sm:$0xff] %v661
  %s664 = scalar_lea.vmem %s3, 16
  %665 = vst [vmem:[%s664] sm:$0xff] %v654
  %666 = vst [vmem:[%s664 + $0x8] sm:$0xff] %v656
  // Predicated region
  $region14: #{bert_span_forward.1} parent=0 // pred_check
    _
  $region15: #{bert_span_forward.1} parent=0 // pred_check_branch
    %668 = sbr.rel (0) target = $region17
  $region16: #{bert_span_forward.1} parent=0 // pred_region
    _
  $region17: #{bert_span_forward.1} parent=0 // pred_fallthru
    _
  // Predicated region
  $region18: #{bert_span_forward.1} parent=0 // pred_check
    _
  $region19: #{bert_span_forward.1} parent=0 // pred_check_branch
    %670 = sbr.rel (0) target = $region21
  $region20: #{bert_span_forward.1} parent=0 // pred_region
    _
  $region21: #{bert_span_forward.1} parent=0 // pred_fallthru
    _

</llo_original>
